<compile_context>
chip_gen: v6e
topology: v6e:2x2x1
jax: 0.10.0
libtpu: 0.0.40
codegen_flags: <defaults>
</compile_context>

<pallas_src>
import math

import jax
import jax.numpy as jnp
from jax.experimental import pallas as pl
from jax.experimental.pallas import tpu as pltpu

EPS = 1e-12            # F.normalize eps
MAX_BATCH_TILE = 8192  # lanes per grid step (multiple of 128)


def _round_up(n, m):
    return ((n + m - 1) // m) * m


def _normalized_dot(wn_ref, x_ref):
    """Return s = normalize(x, dim=feat) @ normalize(center)^T, shape (1, TB).

    x_ref: (D, TB) VMEM, lane-dense over the batch.
    wn_ref: (D,) SMEM, pre-normalized center.
    The D-loop is a compile-time Python unroll (D is tiny, default 2):
    pure VPU multiply/adds, no cross-lane reduce, no MXU.
    """
    D = x_ref.shape[0]
    x0 = x_ref[pl.ds(0, 1), :]                      # (1, TB)
    sumsq = x0 * x0
    dot = x0 * wn_ref[0]
    for i in range(1, D):
        xi = x_ref[pl.ds(i, 1), :]
        sumsq = sumsq + xi * xi
        dot = dot + xi * wn_ref[i]
    # rsqrt(max(ss, EPS^2)) == 1/max(sqrt(ss), EPS): torch F.normalize clamp,
    # but the divide+sqrt become a single EUP rsqrt (free VLIW slot).
    inv_norm = jax.lax.rsqrt(jnp.maximum(sumsq, EPS * EPS))
    return dot * inv_norm


def _oc_score_kernel(wn_ref, x_ref, o_ref):
    """labels == None branch: o = -(x_n @ w_n^T), shape (1, TB)."""
    o_ref[...] = -_normalized_dot(wn_ref, x_ref)


def _make_oc_margin_kernel(r_real, r_fake, alpha):
    # Built exactly once per layer instance (stable function identity).
    def _oc_margin_kernel(wn_ref, x_ref, lab_ref, o_ref):
        """labels branch: one-class margins then scale by alpha, (1, TB)."""
        s = _normalized_dot(wn_ref, x_ref)          # (1, TB)
        lab = lab_ref[...]                          # (1, TB) int32
        s = jnp.where(lab == 0, r_real - s, s)
        s = jnp.where(lab == 1, s - r_fake, s)
        o_ref[...] = alpha * s

    return _oc_margin_kernel


class OCLayerPallas:
    def __init__(self, feat_dim=2, r_real=0.9, r_fake=0.5, alpha=20.0, key=None):
        self.feat_dim = int(feat_dim)
        self.r_real = float(r_real)
        self.r_fake = float(r_fake)
        self.alpha = float(alpha)
        if key is None:
            key = jax.random.PRNGKey(0)
        # nn.init.kaiming_uniform_(center, a=0.25) on shape (1, feat_dim):
        # fan_in = feat_dim, gain = sqrt(2/(1+a^2)), bound = gain*sqrt(3/fan_in)
        a = 0.25
        gain = math.sqrt(2.0 / (1.0 + a * a))
        bound = gain * math.sqrt(3.0 / self.feat_dim)
        self.center = jax.random.uniform(
            key, (1, self.feat_dim), dtype=jnp.float32, minval=-bound, maxval=bound
        )
        # Precompute normalized center once (constant parameter in forward).
        nrm = jnp.sqrt(jnp.sum(self.center * self.center, axis=1, keepdims=True))
        self.center_n = (self.center / jnp.maximum(nrm, EPS))[0]  # (D,) f32

        # Kernel closures built once; compiled callables cached per (B_pad, TB).
        self._margin_kernel = _make_oc_margin_kernel(self.r_real, self.r_fake, self.alpha)
        self._score_calls = {}
        self._margin_calls = {}

    # ---- tiling / compiled-callable cache -------------------------------

    def _tiles(self, B):
        tb = min(_round_up(B, 128), MAX_BATCH_TILE)  # lane-tile, multiple of 128
        b_pad = _round_up(B, tb)
        return tb, b_pad

    def _get_score_call(self, b_pad, tb):
        key = (b_pad, tb)
        fn = self._score_calls.get(key)
        if fn is None:
            D = self.feat_dim
            fn = jax.jit(
                pl.pallas_call(
                    _oc_score_kernel,
                    out_shape=jax.ShapeDtypeStruct((1, b_pad), jnp.float32),
                    grid=(b_pad // tb,),
                    in_specs=[
                        pl.BlockSpec(memory_space=pltpu.MemorySpace.SMEM),  # wn (D,)
                        pl.BlockSpec((D, tb), lambda i: (0, i)),            # x (D, B_pad)
                    ],
                    out_specs=pl.BlockSpec((1, tb), lambda i: (0, i)),
                    compiler_params=pltpu.CompilerParams(
                        dimension_semantics=("parallel",)
                    ),
                )
            )
            self._score_calls[key] = fn
        return fn

    def _get_margin_call(self, b_pad, tb):
        key = (b_pad, tb)
        fn = self._margin_calls.get(key)
        if fn is None:
            D = self.feat_dim
            fn = jax.jit(
                pl.pallas_call(
                    self._margin_kernel,
                    out_shape=jax.ShapeDtypeStruct((1, b_pad), jnp.float32),
                    grid=(b_pad // tb,),
                    in_specs=[
                        pl.BlockSpec(memory_space=pltpu.MemorySpace.SMEM),  # wn (D,)
                        pl.BlockSpec((D, tb), lambda i: (0, i)),            # x (D, B_pad)
                        pl.BlockSpec((1, tb), lambda i: (0, i)),            # labels
                    ],
                    out_specs=pl.BlockSpec((1, tb), lambda i: (0, i)),
                    compiler_params=pltpu.CompilerParams(
                        dimension_semantics=("parallel",)
                    ),
                )
            )
            self._margin_calls[key] = fn
        return fn

    # ---- forward ---------------------------------------------------------

    def __call__(self, x, labels=None):
        x = jnp.asarray(x, jnp.float32)
        B, D = x.shape
        assert D == self.feat_dim
        tb, b_pad = self._tiles(B)

        # Lane-dense layout: (D, B_pad). Padding columns are all-zero; they
        # normalize to 0 (score 0) and are sliced off below.
        xt = x.T
        if b_pad != B:
            xt = jnp.pad(xt, ((0, 0), (0, b_pad - B)))

        if labels is None:
            out = self._get_score_call(b_pad, tb)(self.center_n, xt)  # (1, B_pad)
            return out[0, :B]                                         # (B,)

        lab = jnp.asarray(labels, jnp.int32).reshape(1, B)
        if b_pad != B:
            lab = jnp.pad(lab, ((0, 0), (0, b_pad - B)))
        out = self._get_margin_call(b_pad, tb)(self.center_n, xt, lab)  # (1, B_pad)
        return out[0, :B][:, None]                                      # (B, 1)


# ---- pure-JAX reference (mirrors the PyTorch forward) ---------------------

def _reference(x, center, labels, r_real, r_fake, alpha):
    wn = center / jnp.maximum(
        jnp.sqrt(jnp.sum(center * center, axis=1, keepdims=True)), EPS
    )
    xn = x / jnp.maximum(jnp.sqrt(jnp.sum(x * x, axis=1, keepdims=True)), EPS)
    scores = xn @ wn.T
    if labels is None:
        return -scores[:, 0]
    lab = labels.reshape(-1, 1)
    s = jnp.where(lab == 0, r_real - scores, scores)
    s = jnp.where(lab == 1, scores - r_fake, s)
    return alpha * s


if __name__ == "__main__":
    key = jax.random.PRNGKey(0)
    k_x, k_c, k_l, k_x2, k_l2 = jax.random.split(key, 5)

    B, D = 8, 2  # batch=8, feat_dim=2 (module default)
    x = jax.random.normal(k_x, (B, D), dtype=jnp.float32)
    labels = jax.random.randint(k_l, (B,), 0, 2, dtype=jnp.int32)

    layer = OCLayerPallas(feat_dim=D, key=k_c)

    # labels == None branch
    out_none = jax.block_until_ready(layer(x))
    ref_none = _reference(x, layer.center, None, layer.r_real, layer.r_fake, layer.alpha)
    assert out_none.shape == (B,)
    assert jnp.allclose(out_none, ref_none, atol=1e-5), "no-label branch mismatch"

    # labels branch
    out_lab = jax.block_until_ready(layer(x, labels))
    ref_lab = _reference(x, layer.center, labels, layer.r_real, layer.r_fake, layer.alpha)
    assert out_lab.shape == (B, 1)
    assert jnp.allclose(out_lab, ref_lab, atol=1e-5), "label branch mismatch"

    # second call with same shapes: hits the cached jitted pallas_call (no recompile)
    out_lab2 = jax.block_until_ready(layer(x, labels))
    assert jnp.allclose(out_lab2, ref_lab, atol=1e-5)

    # a batch size that exercises lane padding (200 -> padded to 256 lanes)
    B2 = 200
    x2 = jax.random.normal(k_x2, (B2, D), dtype=jnp.float32)
    labels2 = jax.random.randint(k_l2, (B2,), 0, 2, dtype=jnp.int32)
    out_lab3 = jax.block_until_ready(layer(x2, labels2))
    ref_lab3 = _reference(x2, layer.center, labels2, layer.r_real, layer.r_fake, layer.alpha)
    assert out_lab3.shape == (B2, 1)
    assert jnp.allclose(out_lab3, ref_lab3, atol=1e-5), "padded label branch mismatch"

    print("KERNEL_OK")
</pallas_src>

<mosaic_0001>
module attributes {stable_mosaic.version = 11 : i64} {
  func.func @_oc_score_kernel(%arg0: i32, %arg1: memref<2xf32, #tpu.memory_space<smem>>, %arg2: memref<2x128xf32, #tpu.memory_space<vmem>>, %arg3: memref<1x128xf32, #tpu.memory_space<vmem>>) attributes {dimension_semantics = [#tpu.dimension_semantics<parallel>], iteration_bounds = array<i64: 1>, scalar_prefetch = 0 : i64, scratch_operands = 0 : i64, tpu.core_type = #tpu.core_type<tc>, window_params = [{transform_indices = @transform_0, window_bounds = array<i64: 2>}, {transform_indices = @transform_1, window_bounds = array<i64: 2, 128>}, {transform_indices = @transform_2, window_bounds = array<i64: 1, 128>}]} {
    %c0 = arith.constant 0 : index
    %c0_0 = arith.constant 0 : index
    %0 = vector.load %arg2[%c0, %c0_0] : memref<2x128xf32, #tpu.memory_space<vmem>>, vector<1x128xf32>
    %1 = arith.mulf %0, %0 : vector<1x128xf32>
    %c0_1 = arith.constant 0 : index
    %2 = memref.load %arg1[%c0_1] : memref<2xf32, #tpu.memory_space<smem>>
    %3 = vector.broadcast %2 : f32 to vector<1x128xf32>
    %4 = arith.mulf %0, %3 : vector<1x128xf32>
    %c1 = arith.constant 1 : index
    %c0_2 = arith.constant 0 : index
    %5 = vector.load %arg2[%c1, %c0_2] : memref<2x128xf32, #tpu.memory_space<vmem>>, vector<1x128xf32>
    %6 = arith.mulf %5, %5 : vector<1x128xf32>
    %7 = arith.addf %1, %6 : vector<1x128xf32>
    %c1_3 = arith.constant 1 : index
    %8 = memref.load %arg1[%c1_3] : memref<2xf32, #tpu.memory_space<smem>>
    %9 = vector.broadcast %8 : f32 to vector<1x128xf32>
    %10 = arith.mulf %5, %9 : vector<1x128xf32>
    %11 = arith.addf %4, %10 : vector<1x128xf32>
    %cst = arith.constant 1.000000e-24 : f32
    %12 = vector.broadcast %cst : f32 to vector<1x128xf32>
    %13 = arith.maximumf %7, %12 : vector<1x128xf32>
    %14 = math.rsqrt %13 : vector<1x128xf32>
    %15 = arith.mulf %11, %14 : vector<1x128xf32>
    %cst_4 = arith.constant 0.000000e+00 : f32
    %16 = vector.broadcast %cst_4 : f32 to vector<1x128xf32>
    %17 = arith.subf %16, %15 : vector<1x128xf32>
    %c0_5 = arith.constant 0 : index
    %c0_6 = arith.constant 0 : index
    %18 = vector.load %arg3[%c0_5, %c0_6] : memref<1x128xf32, #tpu.memory_space<vmem>>, vector<1x128xf32>
    tpu.vector_store %arg3[%c0_5, %c0_6], %17 {strides = array<i32>} : memref<1x128xf32, #tpu.memory_space<vmem>>, vector<1x128xf32>,
    return
  }
  func.func @transform_0(%arg0: i32) -> i32 {
    %c0_i32 = arith.constant 0 : i32
    %c0_i32_0 = arith.constant 0 : i32
    return %c0_i32 : i32
  }
  func.func @transform_1(%arg0: i32) -> (i32, i32) {
    %c0_i32 = arith.constant 0 : i32
    %c0_i32_0 = arith.constant 0 : i32
    return %c0_i32, %arg0 : i32, i32
  }
  func.func @transform_2(%arg0: i32) -> (i32, i32) {
    %c0_i32 = arith.constant 0 : i32
    %c0_i32_0 = arith.constant 0 : i32
    return %c0_i32, %arg0 : i32, i32
  }
}

</mosaic_0001>

<llo_original>
// kernel: tpu_custom_call.1
$region0: #{tpu_custom_call.1}
  #allocation0 [shape = 'u32[]', space=smem, size = 0x4, offset = 0x4, fixed_abs, tag = 'smem constant byte address 0x4 - core index']
  #allocation1 [shape = 'u32[144,128]{1,0:T(1,128)}', space=vmem, size = 0x12000, scoped, tag = 'internal scratch']
  %s0 = inlined_call_operand.hbm [shape: f32[2], index: 0, kind: input, shape index: {}]
  %s1 = inlined_call_operand.hbm [shape: f32[2,128], index: 1, kind: input, shape index: {}]
  %s2 = inlined_call_operand.hbm [shape: f32[1,128], index: 2, kind: output, shape index: {}]
  %s3 = sld [smem:[#allocation0]]
  $region26: #{tpu_custom_call.1} parent=0
    _
  %s5 = ssub.s32 1, %s3
  %s6 = scalar_select 0, %s5, %s3
  $region1: #{tpu_custom_call.1} parent=0
    #allocation2 [shape = 'u8[512]{0}', space=smem, size = 0x200, scoped, tag = 'input window, operand 0, single buffered']
    #allocation3 [shape = 's32[1]{0}', space=sflag, size = 0x4, scoped, tag = 'scoped memory for tpu_custom_call.1']
    #allocation4 [shape = 's32[1]{0}', space=sflag, size = 0x4, scoped, tag = 'scoped memory for tpu_custom_call.1']
    #allocation5 [shape = 's32[1]{0}', space=sflag, size = 0x4, scoped, tag = 'scoped memory for tpu_custom_call.1']
    #allocation6 [shape = 'u8[1024]{0}', space=vmem, size = 0x400, scoped, tag = 'input window, operand 1, single buffered']
    #allocation7 [shape = 'u8[512]{0}', space=vmem, size = 0x400, scoped, tag = 'output window, operand 0, single buffered']
    %7 = vsyncpa [#allocation5], 0
    %8 = vsyncpa [#allocation3], 0
    %9 = vsyncpa [#allocation4], 0
    // Predicated region
    $region2: #{tpu_custom_call.1} parent=1 // pred_check
      _
    $region3: #{tpu_custom_call.1} parent=1 // pred_check_branch
      %11 = sbr.rel (0) target = $region5
    $region4: #{tpu_custom_call.1} parent=1 // pred_region
      %s13 = ssub.s32 16, 16
      %14 = vsyncadd [#allocation5], %s13
      %17 = dma.hbm_to_smem %s0, 16, [#allocation2], [#allocation5]
    $region5: #{tpu_custom_call.1} parent=1 // pred_fallthru
      _
    // Predicated region
    $region6: #{tpu_custom_call.1} parent=1 // pred_check
      _
    $region7: #{tpu_custom_call.1} parent=1 // pred_check_branch
      %19 = sbr.rel (0) target = $region9
    $region8: #{tpu_custom_call.1} parent=1 // pred_region
      %s21 = ssub.s32 32, 32
      %22 = vsyncadd [#allocation3], %s21
      %s24 = sshll.u32 [#allocation6], 4
      %s25 = int_to_ptr.vmem [resolvable:$true] %s24
      %27 = dma.hbm_to_vmem [thread:$0]  %s1, 32, %s25, [#allocation3]
    $region9: #{tpu_custom_call.1} parent=1 // pred_fallthru
      _
    // Predicated region
    $region10: #{tpu_custom_call.1} parent=1 // pred_check
      _
    $region11: #{tpu_custom_call.1} parent=1 // pred_check_branch
      %29 = sbr.rel (0) target = $region13
    $region12: #{tpu_custom_call.1} parent=1 // pred_region
      %30 = dma.done [#allocation5], 16
    $region13: #{tpu_custom_call.1} parent=1 // pred_fallthru
      _
    // Predicated region
    $region14: #{tpu_custom_call.1} parent=1 // pred_check
      _
    $region15: #{tpu_custom_call.1} parent=1 // pred_check_branch
      %32 = sbr.rel (0) target = $region17
    $region16: #{tpu_custom_call.1} parent=1 // pred_region
      %33 = dma.done [#allocation3], 32
    $region17: #{tpu_custom_call.1} parent=1 // pred_fallthru
      _
    %34 = sfence
    %v35 = vld [vmem:[#allocation6] sm:$0x1]
    %v36 = vmul.f32 %v35, %v35
    %s37 = sld [smem:[#allocation2]]
    %v38 = vstv %s37
    %v39 = vmul.f32 %v35, %v38
    %v40 = vld [vmem:[#allocation6 + $0x1] sm:$0x1]
    %v41 = vmul.f32 %v40, %v40
    %v42 = vadd.f32 %v36, %v41
    %s43 = sld [smem:[#allocation2 + $0x1]]
    %v44 = vstv %s43
    %v45 = vmul.f32 %v40, %v44
    %v46 = vadd.f32 %v39, %v45
    %v47 = vmax.f32 %v42, 1e-24
    %v48 = vrsqrt.pop %v47
    %v49 = vmul.f32 %v46, %v48
    %v50 = vsub.f32 0.0, %v49
    %51 = vst [vmem:[#allocation7] sm:$0x1] %v50
    // Predicated region
    $region18: #{tpu_custom_call.1} parent=1 // pred_check
      _
    $region19: #{tpu_custom_call.1} parent=1 // pred_check_branch
      %53 = sbr.rel (0) target = $region21
    $region20: #{tpu_custom_call.1} parent=1 // pred_region
      %s55 = ssub.s32 16, 16
      %56 = vsyncadd [#allocation4], %s55
      %s58 = sshll.u32 [#allocation7], 4
      %s59 = int_to_ptr.vmem [resolvable:$true] %s58
      %61 = dma.vmem_to_hbm [thread:$0]  %s59, 16, %s2, [#allocation4]
    $region21: #{tpu_custom_call.1} parent=1 // pred_fallthru
      _
    // Predicated region
    $region22: #{tpu_custom_call.1} parent=1 // pred_check
      _
    $region23: #{tpu_custom_call.1} parent=1 // pred_check_branch
      %63 = sbr.rel (0) target = $region25
    $region24: #{tpu_custom_call.1} parent=1 // pred_region
      %64 = dma.done [#allocation4], 16
    $region25: #{tpu_custom_call.1} parent=1 // pred_fallthru
      _
    %65 = vsyncpa [#allocation3], 1
    %66 = vsyncpa [#allocation4], 1
    %67 = vsyncpa [#allocation5], 1

</llo_original>
